<compile_context>
chip_gen: v6e
topology: v6e:2x2x1
jax: 0.10.0
libtpu: 0.0.40
codegen_flags: <defaults>
</compile_context>

<pallas_src>
import functools

import jax
import jax.numpy as jnp
import numpy as np
from jax.experimental import pallas as pl
from jax.experimental.pallas import tpu as pltpu

_LN_EPS = 1e-5
_INV_SQRT2 = 0.7071067811865476


def _erf(x):
    # Abramowitz & Stegun 7.1.26 rational approximation (max abs err ~1.5e-7),
    # built only from ops with guaranteed Mosaic lowerings (exp -> EUP).
    p = 0.3275911
    a1, a2, a3, a4, a5 = (0.254829592, -0.284496736, 1.421413741,
                          -1.453152027, 1.061405429)
    ax = jnp.abs(x)
    t = 1.0 / (1.0 + p * ax)
    poly = ((((a5 * t + a4) * t + a3) * t + a2) * t + a1) * t
    y = 1.0 - poly * jnp.exp(-ax * ax)
    return jnp.where(x >= 0, y, -y)


def _gelu_exact(x):
    # nn.GELU() default (erf-based).
    return 0.5 * x * (1.0 + _erf(x * _INV_SQRT2))


def _bottleneck_kernel(x_ref, dw_ref, ln_ref, w1_ref, b1_ref, w2_ref, b2_ref,
                       o_ref, *, img_w, n_ch):
    x = x_ref[...]                                  # (B*C, HW) f32, full tiles
    hw = x.shape[-1]

    # --- depthwise 3x3 'same' conv: 9 lane-rolled VPU FMAs ------------------
    # dw_ref[t] = per-channel tap weight * compile-time edge mask (per lane),
    # dw_ref[9] = dw bias; all pre-broadcast to (B*C, HW) in the wrapper.
    # Rolls never mix rows, so channels/images never leak into each other; the
    # masked lanes are exactly the out-of-image ('same' zero-pad) positions.
    acc = dw_ref[9] + x * dw_ref[4]                 # bias + centre tap
    for t in (0, 1, 2, 3, 5, 6, 7, 8):
        s = (t // 3 - 1) * img_w + (t % 3 - 1)      # flat offset of tap t
        acc = acc + pltpu.roll(x, (hw - s) % hw, axis=1) * dw_ref[t]

    # --- LayerNorm over channels (one pass: var = E[x^2] - mean^2) ----------
    # ln_ref = block_diag(ones(C,C)) over the batch: one tiny matmul both sums
    # each image's channels and re-broadcasts the result to its sublane rows.
    inv_c = 1.0 / n_ch
    lnm = ln_ref[...]
    mean = jnp.dot(lnm, acc, preferred_element_type=jnp.float32) * inv_c
    ex2 = jnp.dot(lnm, acc * acc, preferred_element_type=jnp.float32) * inv_c
    var = ex2 - mean * mean
    xn = (acc - mean) * jax.lax.rsqrt(var + _LN_EPS)

    # --- pwconv1 (LN affine pre-folded into weights) -> GELU -> pwconv2 -----
    h = jnp.dot(w1_ref[...], xn, preferred_element_type=jnp.float32) + b1_ref[...]
    g = _gelu_exact(h)
    y = jnp.dot(w2_ref[...], g, preferred_element_type=jnp.float32) + b2_ref[...]

    # --- residual with the block's original input ----------------------------
    o_ref[...] = (y + x).astype(o_ref.dtype)


def bottleneck_forward(x_nchw, params):
    B, C, H, W = x_nchw.shape
    hw = H * W
    med = params["w1"].shape[0]
    rows = B * C
    f32 = jnp.float32

    # Free NCHW -> (B*C, HW) reshape: batch folded into sublanes.
    x_flat = x_nchw.reshape(rows, hw)

    # Compile-time edge-validity masks for the 9 taps of the 'same' conv.
    pos = np.arange(hw)
    hh, ww = pos // W, pos % W
    masks = np.stack(
        [(((hh + (t // 3 - 1)) >= 0) & ((hh + (t // 3 - 1)) < H) &
          ((ww + (t % 3 - 1)) >= 0) & ((ww + (t % 3 - 1)) < W)).astype(np.float32)
         for t in range(9)])                                          # (9, HW)

    # NOTE: everything below only rearranges *parameters* (a few KiB of work);
    # in a real model it would be hoisted to init time.
    dwk = params["dw_w"].reshape(C, 9).astype(f32)                    # (C, 9)
    wtap = dwk.T[:, :, None] * jnp.asarray(masks)[:, None, :]         # (9, C, HW)
    wtap = jnp.tile(wtap, (1, B, 1))                                  # (9, B*C, HW)
    dwb = jnp.broadcast_to(jnp.tile(params["dw_b"].reshape(C, 1), (B, 1)),
                           (rows, hw))                                # (B*C, HW)
    dwpack = jnp.concatenate([wtap, dwb[None]], axis=0)               # (10, B*C, HW)

    # Fold LayerNorm affine into pwconv1; build block-diagonal (over batch)
    # weights so a single matmul processes the whole sublane-folded slab.
    eye_b = jnp.eye(B, dtype=f32)
    w1g = params["w1"] * params["ln_g"][None, :]                      # (med, C)
    b1f = params["w1"] @ params["ln_b"] + params["b1"]                # (med,)
    w1bd = jnp.einsum("ab,mc->ambc", eye_b, w1g).reshape(B * med, rows)
    w2bd = jnp.einsum("ab,cm->acbm", eye_b, params["w2"]).reshape(rows, B * med)
    b1bc = jnp.broadcast_to(jnp.tile(b1f, B)[:, None], (B * med, hw))
    b2bc = jnp.broadcast_to(jnp.tile(params["b2"], B)[:, None], (rows, hw))
    ln_ones = jnp.einsum("ab,cd->acbd", eye_b,
                         jnp.ones((C, C), f32)).reshape(rows, rows)

    kernel = functools.partial(_bottleneck_kernel, img_w=W, n_ch=C)

    # Single invocation, no grid: whole arrays live in VMEM (~150 KiB total),
    # so there is no per-step launch/DMA overhead to hide.
    out = pl.pallas_call(
        kernel,
        out_shape=jax.ShapeDtypeStruct((rows, hw), x_nchw.dtype),
    )(x_flat, dwpack, ln_ones, w1bd, b1bc, w2bd, b2bc)

    return out.reshape(B, C, H, W)


def _reference_forward(x_nchw, p):
    """Pure-JAX (XLA) reference mirroring the PyTorch module semantics."""
    B, C, H, W = x_nchw.shape
    conv = jax.lax.conv_general_dilated(
        x_nchw, p["dw_w"], window_strides=(1, 1), padding="SAME",
        feature_group_count=C,
        dimension_numbers=("NCHW", "OIHW", "NCHW"))
    conv = conv + p["dw_b"].reshape(1, C, 1, 1)
    xh = jnp.transpose(conv, (0, 2, 3, 1))                # NHWC
    mean = jnp.mean(xh, axis=-1, keepdims=True)
    var = jnp.mean((xh - mean) ** 2, axis=-1, keepdims=True)
    xn = (xh - mean) * jax.lax.rsqrt(var + _LN_EPS)
    xn = xn * p["ln_g"] + p["ln_b"]
    h = xn @ p["w1"].T + p["b1"]
    h = jax.nn.gelu(h, approximate=False)
    h = h @ p["w2"].T + p["b2"]
    return jnp.transpose(h, (0, 3, 1, 2)) + x_nchw


if __name__ == "__main__":
    key = jax.random.PRNGKey(0)
    ks = jax.random.split(key, 9)

    # Bottleneck(in_c=4, out_c=4)  (in_c must equal out_c for the residual)
    B, C, H, W = 2, 4, 16, 16
    med = 4 * C

    params = {
        "dw_w": 0.2 * jax.random.normal(ks[0], (C, 1, 3, 3), jnp.float32),  # Conv2d weight (C,1,3,3)
        "dw_b": 0.1 * jax.random.normal(ks[1], (C,), jnp.float32),
        "ln_g": 1.0 + 0.05 * jax.random.normal(ks[2], (C,), jnp.float32),
        "ln_b": 0.05 * jax.random.normal(ks[3], (C,), jnp.float32),
        "w1": 0.2 * jax.random.normal(ks[4], (med, C), jnp.float32),        # Linear weight (out, in)
        "b1": 0.1 * jax.random.normal(ks[5], (med,), jnp.float32),
        "w2": 0.2 * jax.random.normal(ks[6], (C, med), jnp.float32),        # Linear weight (out, in)
        "b2": 0.1 * jax.random.normal(ks[7], (C,), jnp.float32),
    }
    x = jax.random.normal(ks[8], (B, C, H, W), jnp.float32)

    out = jax.block_until_ready(jax.jit(bottleneck_forward)(x, params))
    ref = jax.block_until_ready(_reference_forward(x, params))
    np.testing.assert_allclose(np.asarray(out), np.asarray(ref),
                               atol=1e-3, rtol=1e-3)
    print("KERNEL_OK")
</pallas_src>

<mosaic_0001>
module attributes {stable_mosaic.version = 11 : i64} {
  func.func @_bottleneck_kernel(%arg0: memref<8x256xf32, #tpu.memory_space<vmem>>, %arg1: memref<10x8x256xf32, #tpu.memory_space<vmem>>, %arg2: memref<8x8xf32, #tpu.memory_space<vmem>>, %arg3: memref<32x8xf32, #tpu.memory_space<vmem>>, %arg4: memref<32x256xf32, #tpu.memory_space<vmem>>, %arg5: memref<8x32xf32, #tpu.memory_space<vmem>>, %arg6: memref<8x256xf32, #tpu.memory_space<vmem>>, %arg7: memref<8x256xf32, #tpu.memory_space<vmem>>) attributes {dimension_semantics = [], scalar_prefetch = 0 : i64, scratch_operands = 0 : i64, tpu.core_type = #tpu.core_type<tc>} {
    %c0 = arith.constant 0 : index
    %c0_0 = arith.constant 0 : index
    %0 = vector.load %arg0[%c0, %c0_0] : memref<8x256xf32, #tpu.memory_space<vmem>>, vector<8x256xf32>
    %c9 = arith.constant 9 : index
    %c0_1 = arith.constant 0 : index
    %c0_2 = arith.constant 0 : index
    %1 = vector.load %arg1[%c9, %c0_1, %c0_2] : memref<10x8x256xf32, #tpu.memory_space<vmem>>, vector<1x8x256xf32>
    %2 = vector.shape_cast %1 : vector<1x8x256xf32> to vector<8x256xf32>
    %c4 = arith.constant 4 : index
    %c0_3 = arith.constant 0 : index
    %c0_4 = arith.constant 0 : index
    %3 = vector.load %arg1[%c4, %c0_3, %c0_4] : memref<10x8x256xf32, #tpu.memory_space<vmem>>, vector<1x8x256xf32>
    %4 = vector.shape_cast %3 : vector<1x8x256xf32> to vector<8x256xf32>
    %5 = arith.mulf %0, %4 : vector<8x256xf32>
    %6 = arith.addf %2, %5 : vector<8x256xf32>
    %c17_i32 = arith.constant 17 : i32
    %7 = tpu.dynamic_rotate %0 by %c17_i32 dim 1 : vector<8x256xf32>, i32 -> vector<8x256xf32>
    %c0_5 = arith.constant 0 : index
    %c0_6 = arith.constant 0 : index
    %c0_7 = arith.constant 0 : index
    %8 = vector.load %arg1[%c0_5, %c0_6, %c0_7] : memref<10x8x256xf32, #tpu.memory_space<vmem>>, vector<1x8x256xf32>
    %9 = vector.shape_cast %8 : vector<1x8x256xf32> to vector<8x256xf32>
    %10 = arith.mulf %7, %9 : vector<8x256xf32>
    %11 = arith.addf %6, %10 : vector<8x256xf32>
    %c16_i32 = arith.constant 16 : i32
    %12 = tpu.dynamic_rotate %0 by %c16_i32 dim 1 : vector<8x256xf32>, i32 -> vector<8x256xf32>
    %c1 = arith.constant 1 : index
    %c0_8 = arith.constant 0 : index
    %c0_9 = arith.constant 0 : index
    %13 = vector.load %arg1[%c1, %c0_8, %c0_9] : memref<10x8x256xf32, #tpu.memory_space<vmem>>, vector<1x8x256xf32>
    %14 = vector.shape_cast %13 : vector<1x8x256xf32> to vector<8x256xf32>
    %15 = arith.mulf %12, %14 : vector<8x256xf32>
    %16 = arith.addf %11, %15 : vector<8x256xf32>
    %c15_i32 = arith.constant 15 : i32
    %17 = tpu.dynamic_rotate %0 by %c15_i32 dim 1 : vector<8x256xf32>, i32 -> vector<8x256xf32>
    %c2 = arith.constant 2 : index
    %c0_10 = arith.constant 0 : index
    %c0_11 = arith.constant 0 : index
    %18 = vector.load %arg1[%c2, %c0_10, %c0_11] : memref<10x8x256xf32, #tpu.memory_space<vmem>>, vector<1x8x256xf32>
    %19 = vector.shape_cast %18 : vector<1x8x256xf32> to vector<8x256xf32>
    %20 = arith.mulf %17, %19 : vector<8x256xf32>
    %21 = arith.addf %16, %20 : vector<8x256xf32>
    %c1_i32 = arith.constant 1 : i32
    %22 = tpu.dynamic_rotate %0 by %c1_i32 dim 1 : vector<8x256xf32>, i32 -> vector<8x256xf32>
    %c3 = arith.constant 3 : index
    %c0_12 = arith.constant 0 : index
    %c0_13 = arith.constant 0 : index
    %23 = vector.load %arg1[%c3, %c0_12, %c0_13] : memref<10x8x256xf32, #tpu.memory_space<vmem>>, vector<1x8x256xf32>
    %24 = vector.shape_cast %23 : vector<1x8x256xf32> to vector<8x256xf32>
    %25 = arith.mulf %22, %24 : vector<8x256xf32>
    %26 = arith.addf %21, %25 : vector<8x256xf32>
    %c255_i32 = arith.constant 255 : i32
    %27 = tpu.dynamic_rotate %0 by %c255_i32 dim 1 : vector<8x256xf32>, i32 -> vector<8x256xf32>
    %c5 = arith.constant 5 : index
    %c0_14 = arith.constant 0 : index
    %c0_15 = arith.constant 0 : index
    %28 = vector.load %arg1[%c5, %c0_14, %c0_15] : memref<10x8x256xf32, #tpu.memory_space<vmem>>, vector<1x8x256xf32>
    %29 = vector.shape_cast %28 : vector<1x8x256xf32> to vector<8x256xf32>
    %30 = arith.mulf %27, %29 : vector<8x256xf32>
    %31 = arith.addf %26, %30 : vector<8x256xf32>
    %c241_i32 = arith.constant 241 : i32
    %32 = tpu.dynamic_rotate %0 by %c241_i32 dim 1 : vector<8x256xf32>, i32 -> vector<8x256xf32>
    %c6 = arith.constant 6 : index
    %c0_16 = arith.constant 0 : index
    %c0_17 = arith.constant 0 : index
    %33 = vector.load %arg1[%c6, %c0_16, %c0_17] : memref<10x8x256xf32, #tpu.memory_space<vmem>>, vector<1x8x256xf32>
    %34 = vector.shape_cast %33 : vector<1x8x256xf32> to vector<8x256xf32>
    %35 = arith.mulf %32, %34 : vector<8x256xf32>
    %36 = arith.addf %31, %35 : vector<8x256xf32>
    %c240_i32 = arith.constant 240 : i32
    %37 = tpu.dynamic_rotate %0 by %c240_i32 dim 1 : vector<8x256xf32>, i32 -> vector<8x256xf32>
    %c7 = arith.constant 7 : index
    %c0_18 = arith.constant 0 : index
    %c0_19 = arith.constant 0 : index
    %38 = vector.load %arg1[%c7, %c0_18, %c0_19] : memref<10x8x256xf32, #tpu.memory_space<vmem>>, vector<1x8x256xf32>
    %39 = vector.shape_cast %38 : vector<1x8x256xf32> to vector<8x256xf32>
    %40 = arith.mulf %37, %39 : vector<8x256xf32>
    %41 = arith.addf %36, %40 : vector<8x256xf32>
    %c239_i32 = arith.constant 239 : i32
    %42 = tpu.dynamic_rotate %0 by %c239_i32 dim 1 : vector<8x256xf32>, i32 -> vector<8x256xf32>
    %c8 = arith.constant 8 : index
    %c0_20 = arith.constant 0 : index
    %c0_21 = arith.constant 0 : index
    %43 = vector.load %arg1[%c8, %c0_20, %c0_21] : memref<10x8x256xf32, #tpu.memory_space<vmem>>, vector<1x8x256xf32>
    %44 = vector.shape_cast %43 : vector<1x8x256xf32> to vector<8x256xf32>
    %45 = arith.mulf %42, %44 : vector<8x256xf32>
    %46 = arith.addf %41, %45 : vector<8x256xf32>
    %c0_22 = arith.constant 0 : index
    %c0_23 = arith.constant 0 : index
    %47 = vector.load %arg2[%c0_22, %c0_23] : memref<8x8xf32, #tpu.memory_space<vmem>>, vector<8x8xf32>
    %cst = arith.constant dense<0.000000e+00> : vector<8x256xf32>
    %48 = tpu.matmul %47, %46, %cst {dimension_numbers = #tpu.dot_dimension_numbers<[1], [0], [0], [1], [0, 0, 1, 1], [], []>} : vector<8x8xf32>, vector<8x256xf32>, vector<8x256xf32> -> vector<8x256xf32>
    %cst_24 = arith.constant 2.500000e-01 : f32
    %49 = vector.broadcast %cst_24 : f32 to vector<8x256xf32>
    %50 = arith.mulf %48, %49 : vector<8x256xf32>
    %51 = arith.mulf %46, %46 : vector<8x256xf32>
    %cst_25 = arith.constant dense<0.000000e+00> : vector<8x256xf32>
    %52 = tpu.matmul %47, %51, %cst_25 {dimension_numbers = #tpu.dot_dimension_numbers<[1], [0], [0], [1], [0, 0, 1, 1], [], []>} : vector<8x8xf32>, vector<8x256xf32>, vector<8x256xf32> -> vector<8x256xf32>
    %cst_26 = arith.constant 2.500000e-01 : f32
    %53 = vector.broadcast %cst_26 : f32 to vector<8x256xf32>
    %54 = arith.mulf %52, %53 : vector<8x256xf32>
    %55 = arith.mulf %50, %50 : vector<8x256xf32>
    %56 = arith.subf %54, %55 : vector<8x256xf32>
    %57 = arith.subf %46, %50 : vector<8x256xf32>
    %cst_27 = arith.constant 9.99999974E-6 : f32
    %58 = vector.broadcast %cst_27 : f32 to vector<8x256xf32>
    %59 = arith.addf %56, %58 : vector<8x256xf32>
    %60 = math.rsqrt %59 : vector<8x256xf32>
    %61 = arith.mulf %57, %60 : vector<8x256xf32>
    %c0_28 = arith.constant 0 : index
    %c0_29 = arith.constant 0 : index
    %62 = vector.load %arg3[%c0_28, %c0_29] : memref<32x8xf32, #tpu.memory_space<vmem>>, vector<32x8xf32>
    %cst_30 = arith.constant dense<0.000000e+00> : vector<32x256xf32>
    %63 = tpu.matmul %62, %61, %cst_30 {dimension_numbers = #tpu.dot_dimension_numbers<[1], [0], [0], [1], [0, 0, 1, 1], [], []>} : vector<32x8xf32>, vector<8x256xf32>, vector<32x256xf32> -> vector<32x256xf32>
    %c0_31 = arith.constant 0 : index
    %c0_32 = arith.constant 0 : index
    %64 = vector.load %arg4[%c0_31, %c0_32] : memref<32x256xf32, #tpu.memory_space<vmem>>, vector<32x256xf32>
    %65 = arith.addf %63, %64 : vector<32x256xf32>
    %cst_33 = arith.constant 5.000000e-01 : f32
    %66 = vector.broadcast %cst_33 : f32 to vector<32x256xf32>
    %67 = arith.mulf %66, %65 : vector<32x256xf32>
    %cst_34 = arith.constant 0.707106769 : f32
    %68 = vector.broadcast %cst_34 : f32 to vector<32x256xf32>
    %69 = arith.mulf %65, %68 : vector<32x256xf32>
    %70 = math.absf %69 : vector<32x256xf32>
    %cst_35 = arith.constant 0.327591091 : f32
    %71 = vector.broadcast %cst_35 : f32 to vector<32x256xf32>
    %72 = arith.mulf %71, %70 : vector<32x256xf32>
    %cst_36 = arith.constant 1.000000e+00 : f32
    %73 = vector.broadcast %cst_36 : f32 to vector<32x256xf32>
    %74 = arith.addf %73, %72 : vector<32x256xf32>
    %cst_37 = arith.constant 1.000000e+00 : f32
    %75 = vector.broadcast %cst_37 : f32 to vector<32x256xf32>
    %76 = arith.divf %75, %74 : vector<32x256xf32>
    %cst_38 = arith.constant 1.06140542 : f32
    %77 = vector.broadcast %cst_38 : f32 to vector<32x256xf32>
    %78 = arith.mulf %77, %76 : vector<32x256xf32>
    %cst_39 = arith.constant -1.45315206 : f32
    %79 = vector.broadcast %cst_39 : f32 to vector<32x256xf32>
    %80 = arith.addf %78, %79 : vector<32x256xf32>
    %81 = arith.mulf %80, %76 : vector<32x256xf32>
    %cst_40 = arith.constant 1.42141378 : f32
    %82 = vector.broadcast %cst_40 : f32 to vector<32x256xf32>
    %83 = arith.addf %81, %82 : vector<32x256xf32>
    %84 = arith.mulf %83, %76 : vector<32x256xf32>
    %cst_41 = arith.constant -0.284496725 : f32
    %85 = vector.broadcast %cst_41 : f32 to vector<32x256xf32>
    %86 = arith.addf %84, %85 : vector<32x256xf32>
    %87 = arith.mulf %86, %76 : vector<32x256xf32>
    %cst_42 = arith.constant 0.254829586 : f32
    %88 = vector.broadcast %cst_42 : f32 to vector<32x256xf32>
    %89 = arith.addf %87, %88 : vector<32x256xf32>
    %90 = arith.mulf %89, %76 : vector<32x256xf32>
    %cst_43 = arith.constant 0.000000e+00 : f32
    %91 = vector.broadcast %cst_43 : f32 to vector<32x256xf32>
    %92 = arith.subf %91, %70 : vector<32x256xf32>
    %93 = arith.mulf %92, %70 : vector<32x256xf32>
    %94 = math.exp %93 : vector<32x256xf32>
    %95 = arith.mulf %90, %94 : vector<32x256xf32>
    %cst_44 = arith.constant 1.000000e+00 : f32
    %96 = vector.broadcast %cst_44 : f32 to vector<32x256xf32>
    %97 = arith.subf %96, %95 : vector<32x256xf32>
    %cst_45 = arith.constant 0.000000e+00 : f32
    %98 = vector.broadcast %cst_45 : f32 to vector<32x256xf32>
    %99 = arith.cmpf oge, %69, %98 : vector<32x256xf32>
    %cst_46 = arith.constant 0.000000e+00 : f32
    %100 = vector.broadcast %cst_46 : f32 to vector<32x256xf32>
    %101 = arith.subf %100, %97 : vector<32x256xf32>
    %102 = arith.select %99, %97, %101 : vector<32x256xi1>, vector<32x256xf32>
    %cst_47 = arith.constant 1.000000e+00 : f32
    %103 = vector.broadcast %cst_47 : f32 to vector<32x256xf32>
    %104 = arith.addf %103, %102 : vector<32x256xf32>
    %105 = arith.mulf %67, %104 : vector<32x256xf32>
    %c0_48 = arith.constant 0 : index
    %c0_49 = arith.constant 0 : index
    %106 = vector.load %arg5[%c0_48, %c0_49] : memref<8x32xf32, #tpu.memory_space<vmem>>, vector<8x32xf32>
    %cst_50 = arith.constant dense<0.000000e+00> : vector<8x256xf32>
    %107 = tpu.matmul %106, %105, %cst_50 {dimension_numbers = #tpu.dot_dimension_numbers<[1], [0], [0], [1], [0, 0, 1, 1], [], []>} : vector<8x32xf32>, vector<32x256xf32>, vector<8x256xf32> -> vector<8x256xf32>
    %c0_51 = arith.constant 0 : index
    %c0_52 = arith.constant 0 : index
    %108 = vector.load %arg6[%c0_51, %c0_52] : memref<8x256xf32, #tpu.memory_space<vmem>>, vector<8x256xf32>
    %109 = arith.addf %107, %108 : vector<8x256xf32>
    %110 = arith.addf %109, %0 : vector<8x256xf32>
    %c0_53 = arith.constant 0 : index
    %c0_54 = arith.constant 0 : index
    %111 = vector.load %arg7[%c0_53, %c0_54] : memref<8x256xf32, #tpu.memory_space<vmem>>, vector<8x256xf32>
    tpu.vector_store %arg7[%c0_53, %c0_54], %110 {strides = array<i32>} : memref<8x256xf32, #tpu.memory_space<vmem>>, vector<8x256xf32>,
    return
  }
}

</mosaic_0001>

<llo_original>
// kernel: tile.23
$region0: #{tile.23}
  %s0 = inlined_call_operand.vmem [shape: f32[9,2,4,256], index: 0, kind: input, shape index: {}]
  %s1 = inlined_call_operand.vmem [shape: f32[9,8,256], index: 1, kind: output, shape index: {}]
  $region1: #{tile.23} parent=0
    #allocation0 [shape = 'u8[147456]{0}', space=vmem, size = 0x24000, scoped, tag = 'scoped mem for input reshape']
    %s3 = sshll.u32 1, 4
    %s4 = ssub.s32 %s3, 1
    %s5 = smul.addr 4, 35
    %s6 = scalar_lea.vmem %s0, %s5
    %v7 = vld [vmem:[%s6] sm:%s4]
    %s8 = scalar_lea.vmem [#allocation0], 280
    %9 = vst [vmem:[%s8] sm:%s4] %v7
    %s10 = smul.addr 4, 34
    %s11 = scalar_lea.vmem %s0, %s10
    %v12 = vld [vmem:[%s11] sm:%s4]
    %s13 = scalar_lea.vmem [#allocation0], 272
    %14 = vst [vmem:[%s13] sm:%s4] %v12
    %s15 = smul.addr 4, 33
    %s16 = scalar_lea.vmem %s0, %s15
    %v17 = vld [vmem:[%s16] sm:%s4]
    %s18 = scalar_lea.vmem [#allocation0], 264
    %19 = vst [vmem:[%s18] sm:%s4] %v17
    %s20 = smul.addr 4, 32
    %s21 = scalar_lea.vmem %s0, %s20
    %v22 = vld [vmem:[%s21] sm:%s4]
    %s23 = scalar_lea.vmem [#allocation0], 256
    %24 = vst [vmem:[%s23] sm:%s4] %v22
    %s25 = smul.addr 4, 31
    %s26 = scalar_lea.vmem %s0, %s25
    %v27 = vld [vmem:[%s26] sm:%s4]
    %s28 = scalar_lea.vmem [#allocation0], 248
    %29 = vst [vmem:[%s28] sm:%s4] %v27
    %s30 = smul.addr 4, 30
    %s31 = scalar_lea.vmem %s0, %s30
    %v32 = vld [vmem:[%s31] sm:%s4]
    %s33 = scalar_lea.vmem [#allocation0], 240
    %34 = vst [vmem:[%s33] sm:%s4] %v32
    %s35 = smul.addr 4, 29
    %s36 = scalar_lea.vmem %s0, %s35
    %v37 = vld [vmem:[%s36] sm:%s4]
    %s38 = scalar_lea.vmem [#allocation0], 232
    %39 = vst [vmem:[%s38] sm:%s4] %v37
    %s40 = smul.addr 4, 28
    %s41 = scalar_lea.vmem %s0, %s40
    %v42 = vld [vmem:[%s41] sm:%s4]
    %s43 = scalar_lea.vmem [#allocation0], 224
    %44 = vst [vmem:[%s43] sm:%s4] %v42
    %s45 = smul.addr 4, 27
    %s46 = scalar_lea.vmem %s0, %s45
    %v47 = vld [vmem:[%s46] sm:%s4]
    %s48 = scalar_lea.vmem [#allocation0], 216
    %49 = vst [vmem:[%s48] sm:%s4] %v47
    %s50 = smul.addr 4, 26
    %s51 = scalar_lea.vmem %s0, %s50
    %v52 = vld [vmem:[%s51] sm:%s4]
    %s53 = scalar_lea.vmem [#allocation0], 208
    %54 = vst [vmem:[%s53] sm:%s4] %v52
    %s55 = smul.addr 4, 25
    %s56 = scalar_lea.vmem %s0, %s55
    %v57 = vld [vmem:[%s56] sm:%s4]
    %s58 = scalar_lea.vmem [#allocation0], 200
    %59 = vst [vmem:[%s58] sm:%s4] %v57
    %s60 = smul.addr 4, 24
    %s61 = scalar_lea.vmem %s0, %s60
    %v62 = vld [vmem:[%s61] sm:%s4]
    %s63 = scalar_lea.vmem [#allocation0], 192
    %64 = vst [vmem:[%s63] sm:%s4] %v62
    %s65 = smul.addr 4, 23
    %s66 = scalar_lea.vmem %s0, %s65
    %v67 = vld [vmem:[%s66] sm:%s4]
    %s68 = scalar_lea.vmem [#allocation0], 184
    %69 = vst [vmem:[%s68] sm:%s4] %v67
    %s70 = smul.addr 4, 22
    %s71 = scalar_lea.vmem %s0, %s70
    %v72 = vld [vmem:[%s71] sm:%s4]
    %s73 = scalar_lea.vmem [#allocation0], 176
    %74 = vst [vmem:[%s73] sm:%s4] %v72
    %s75 = smul.addr 4, 21
    %s76 = scalar_lea.vmem %s0, %s75
    %v77 = vld [vmem:[%s76] sm:%s4]
    %s78 = scalar_lea.vmem [#allocation0], 168
    %79 = vst [vmem:[%s78] sm:%s4] %v77
    %s80 = smul.addr 4, 20
    %s81 = scalar_lea.vmem %s0, %s80
    %v82 = vld [vmem:[%s81] sm:%s4]
    %s83 = scalar_lea.vmem [#allocation0], 160
    %84 = vst [vmem:[%s83] sm:%s4] %v82
    %s85 = smul.addr 4, 19
    %s86 = scalar_lea.vmem %s0, %s85
    %v87 = vld [vmem:[%s86] sm:%s4]
    %s88 = scalar_lea.vmem [#allocation0], 152
    %89 = vst [vmem:[%s88] sm:%s4] %v87
    %s90 = smul.addr 4, 18
    %s91 = scalar_lea.vmem %s0, %s90
    %v92 = vld [vmem:[%s91] sm:%s4]
    %s93 = scalar_lea.vmem [#allocation0], 144
    %94 = vst [vmem:[%s93] sm:%s4] %v92
    %s95 = smul.addr 4, 17
    %s96 = scalar_lea.vmem %s0, %s95
    %v97 = vld [vmem:[%s96] sm:%s4]
    %s98 = scalar_lea.vmem [#allocation0], 136
    %99 = vst [vmem:[%s98] sm:%s4] %v97
    %s100 = smul.addr 4, 16
    %s101 = scalar_lea.vmem %s0, %s100
    %v102 = vld [vmem:[%s101] sm:%s4]
    %s103 = scalar_lea.vmem [#allocation0], 128
    %104 = vst [vmem:[%s103] sm:%s4] %v102
    %s105 = smul.addr 4, 15
    %s106 = scalar_lea.vmem %s0, %s105
    %v107 = vld [vmem:[%s106] sm:%s4]
    %s108 = scalar_lea.vmem [#allocation0], 120
    %109 = vst [vmem:[%s108] sm:%s4] %v107
    %s110 = smul.addr 4, 14
    %s111 = scalar_lea.vmem %s0, %s110
    %v112 = vld [vmem:[%s111] sm:%s4]
    %s113 = scalar_lea.vmem [#allocation0], 112
    %114 = vst [vmem:[%s113] sm:%s4] %v112
    %s115 = smul.addr 4, 13
    %s116 = scalar_lea.vmem %s0, %s115
    %v117 = vld [vmem:[%s116] sm:%s4]
    %s118 = scalar_lea.vmem [#allocation0], 104
    %119 = vst [vmem:[%s118] sm:%s4] %v117
    %s120 = smul.addr 4, 12
    %s121 = scalar_lea.vmem %s0, %s120
    %v122 = vld [vmem:[%s121] sm:%s4]
    %s123 = scalar_lea.vmem [#allocation0], 96
    %124 = vst [vmem:[%s123] sm:%s4] %v122
    %s125 = smul.addr 4, 11
    %s126 = scalar_lea.vmem %s0, %s125
    %v127 = vld [vmem:[%s126] sm:%s4]
    %s128 = scalar_lea.vmem [#allocation0], 88
    %129 = vst [vmem:[%s128] sm:%s4] %v127
    %s130 = smul.addr 4, 10
    %s131 = scalar_lea.vmem %s0, %s130
    %v132 = vld [vmem:[%s131] sm:%s4]
    %s133 = scalar_lea.vmem [#allocation0], 80
    %134 = vst [vmem:[%s133] sm:%s4] %v132
    %s135 = smul.addr 4, 9
    %s136 = scalar_lea.vmem %s0, %s135
    %v137 = vld [vmem:[%s136] sm:%s4]
    %s138 = scalar_lea.vmem [#allocation0], 72
    %139 = vst [vmem:[%s138] sm:%s4] %v137
    %s140 = smul.addr 4, 8
    %s141 = scalar_lea.vmem %s0, %s140
    %v142 = vld [vmem:[%s141] sm:%s4]
    %s143 = scalar_lea.vmem [#allocation0], 64
    %144 = vst [vmem:[%s143] sm:%s4] %v142
    %s145 = smul.addr 4, 7
    %s146 = scalar_lea.vmem %s0, %s145
    %v147 = vld [vmem:[%s146] sm:%s4]
    %s148 = scalar_lea.vmem [#allocation0], 56
    %149 = vst [vmem:[%s148] sm:%s4] %v147
    %s150 = smul.addr 4, 6
    %s151 = scalar_lea.vmem %s0, %s150
    %v152 = vld [vmem:[%s151] sm:%s4]
    %s153 = scalar_lea.vmem [#allocation0], 48
    %154 = vst [vmem:[%s153] sm:%s4] %v152
    %s155 = smul.addr 4, 5
    %s156 = scalar_lea.vmem %s0, %s155
    %v157 = vld [vmem:[%s156] sm:%s4]
    %s158 = scalar_lea.vmem [#allocation0], 40
    %159 = vst [vmem:[%s158] sm:%s4] %v157
    %s160 = smul.addr 4, 4
    %s161 = scalar_lea.vmem %s0, %s160
    %v162 = vld [vmem:[%s161] sm:%s4]
    %s163 = scalar_lea.vmem [#allocation0], 32
    %164 = vst [vmem:[%s163] sm:%s4] %v162
    %s165 = smul.addr 4, 3
    %s166 = scalar_lea.vmem %s0, %s165
    %v167 = vld [vmem:[%s166] sm:%s4]
    %s168 = scalar_lea.vmem [#allocation0], 24
    %169 = vst [vmem:[%s168] sm:%s4] %v167
    %s170 = smul.addr 4, 2
    %s171 = scalar_lea.vmem %s0, %s170
    %v172 = vld [vmem:[%s171] sm:%s4]
    %s173 = scalar_lea.vmem [#allocation0], 16
    %174 = vst [vmem:[%s173] sm:%s4] %v172
    %s175 = scalar_lea.vmem %s0, 4
    %v176 = vld [vmem:[%s175] sm:%s4]
    %s177 = scalar_lea.vmem [#allocation0], 8
    %178 = vst [vmem:[%s177] sm:%s4] %v176
    %v179 = vld [vmem:[%s0] sm:%s4]
    %180 = vst [vmem:[#allocation0] sm:%s4] %v179
    %v181 = vld [vmem:[#allocation0] sm:$0xf]
    %182 = vst [vmem:[%s1] sm:$0xf] %v181
    %s183 = scalar_lea.vmem [#allocation0], 8
    %v184 = vld [vmem:[%s183] sm:$0xf]
    %s185 = scalar_lea.vmem %s1, 8
    %186 = vst [vmem:[%s185] sm:$0xf] %v184
    %s187 = scalar_lea.vmem [#allocation0], 16
    %v188 = vld [vmem:[%s187] sm:$0xf]
    %s189 = scalar_lea.vmem %s1, 4
    %190 = vst [vmem:[%s189] sm:$0xf] %v188
    %s191 = scalar_lea.vmem [#allocation0], 24
    %v192 = vld [vmem:[%s191] sm:$0xf]
    %s193 = scalar_lea.vmem %s1, 12
    %194 = vst [vmem:[%s193] sm:$0xf] %v192
    %s195 = scalar_lea.vmem [#allocation0], 32
    %v196 = vld [vmem:[%s195] sm:$0xf]
    %s197 = scalar_lea.vmem %s1, 16
    %198 = vst [vmem:[%s197] sm:$0xf] %v196
    %s199 = scalar_lea.vmem [#allocation0], 40
    %v200 = vld [vmem:[%s199] sm:$0xf]
    %s201 = scalar_lea.vmem %s1, 24
    %202 = vst [vmem:[%s201] sm:$0xf] %v200
    %s203 = scalar_lea.vmem [#allocation0], 48
    %v204 = vld [vmem:[%s203] sm:$0xf]
    %s205 = scalar_lea.vmem %s1, 20
    %206 = vst [vmem:[%s205] sm:$0xf] %v204
    %s207 = scalar_lea.vmem [#allocation0], 56
    %v208 = vld [vmem:[%s207] sm:$0xf]
    %s209 = scalar_lea.vmem %s1, 28
    %210 = vst [vmem:[%s209] sm:$0xf] %v208
    %s211 = scalar_lea.vmem [#allocation0], 64
    %v212 = vld [vmem:[%s211] sm:$0xf]
    %s213 = scalar_lea.vmem %s1, 32
    %214 = vst [vmem:[%s213] sm:$0xf] %v212
    %s215 = scalar_lea.vmem [#allocation0], 72
    %v216 = vld [vmem:[%s215] sm:$0xf]
    %s217 = scalar_lea.vmem %s1, 40
    %218 = vst [vmem:[%s217] sm:$0xf] %v216
    %s219 = scalar_lea.vmem [#allocation0], 80
    %v220 = vld [vmem:[%s219] sm:$0xf]
    %s221 = scalar_lea.vmem %s1, 36
    %222 = vst [vmem:[%s221] sm:$0xf] %v220
    %s223 = scalar_lea.vmem [#allocation0], 88
    %v224 = vld [vmem:[%s223] sm:$0xf]
    %s225 = scalar_lea.vmem %s1, 44
    %226 = vst [vmem:[%s225] sm:$0xf] %v224
    %s227 = scalar_lea.vmem [#allocation0], 96
    %v228 = vld [vmem:[%s227] sm:$0xf]
    %s229 = scalar_lea.vmem %s1, 48
    %230 = vst [vmem:[%s229] sm:$0xf] %v228
    %s231 = scalar_lea.vmem [#allocation0], 104
    %v232 = vld [vmem:[%s231] sm:$0xf]
    %s233 = scalar_lea.vmem %s1, 56
    %234 = vst [vmem:[%s233] sm:$0xf] %v232
    %s235 = scalar_lea.vmem [#allocation0], 112
    %v236 = vld [vmem:[%s235] sm:$0xf]
    %s237 = scalar_lea.vmem %s1, 52
    %238 = vst [vmem:[%s237] sm:$0xf] %v236
    %s239 = scalar_lea.vmem [#allocation0], 120
    %v240 = vld [vmem:[%s239] sm:$0xf]
    %s241 = scalar_lea.vmem %s1, 60
    %242 = vst [vmem:[%s241] sm:$0xf] %v240
    %s243 = scalar_lea.vmem [#allocation0], 128
    %v244 = vld [vmem:[%s243] sm:$0xf]
    %s245 = scalar_lea.vmem %s1, 64
    %246 = vst [vmem:[%s245] sm:$0xf] %v244
    %s247 = scalar_lea.vmem [#allocation0], 136
    %v248 = vld [vmem:[%s247] sm:$0xf]
    %s249 = scalar_lea.vmem %s1, 72
    %250 = vst [vmem:[%s249] sm:$0xf] %v248
    %s251 = scalar_lea.vmem [#allocation0], 144
    %v252 = vld [vmem:[%s251] sm:$0xf]
    %s253 = scalar_lea.vmem %s1, 68
    %254 = vst [vmem:[%s253] sm:$0xf] %v252
    %s255 = scalar_lea.vmem [#allocation0], 152
    %v256 = vld [vmem:[%s255] sm:$0xf]
    %s257 = scalar_lea.vmem %s1, 76
    %258 = vst [vmem:[%s257] sm:$0xf] %v256
    %s259 = scalar_lea.vmem [#allocation0], 160
    %v260 = vld [vmem:[%s259] sm:$0xf]
    %s261 = scalar_lea.vmem %s1, 80
    %262 = vst [vmem:[%s261] sm:$0xf] %v260
    %s263 = scalar_lea.vmem [#allocation0], 168
    %v264 = vld [vmem:[%s263] sm:$0xf]
    %s265 = scalar_lea.vmem %s1, 88
    %266 = vst [vmem:[%s265] sm:$0xf] %v264
    %s267 = scalar_lea.vmem [#allocation0], 176
    %v268 = vld [vmem:[%s267] sm:$0xf]
    %s269 = scalar_lea.vmem %s1, 84
    %270 = vst [vmem:[%s269] sm:$0xf] %v268
    %s271 = scalar_lea.vmem [#allocation0], 184
    %v272 = vld [vmem:[%s271] sm:$0xf]
    %s273 = scalar_lea.vmem %s1, 92
    %274 = vst [vmem:[%s273] sm:$0xf] %v272
    %s275 = scalar_lea.vmem [#allocation0], 192
    %v276 = vld [vmem:[%s275] sm:$0xf]
    %s277 = scalar_lea.vmem %s1, 96
    %278 = vst [vmem:[%s277] sm:$0xf] %v276
    %s279 = scalar_lea.vmem [#allocation0], 200
    %v280 = vld [vmem:[%s279] sm:$0xf]
    %s281 = scalar_lea.vmem %s1, 104
    %282 = vst [vmem:[%s281] sm:$0xf] %v280
    %s283 = scalar_lea.vmem [#allocation0], 208
    %v284 = vld [vmem:[%s283] sm:$0xf]
    %s285 = scalar_lea.vmem %s1, 100
    %286 = vst [vmem:[%s285] sm:$0xf] %v284
    %s287 = scalar_lea.vmem [#allocation0], 216
    %v288 = vld [vmem:[%s287] sm:$0xf]
    %s289 = scalar_lea.vmem %s1, 108
    %290 = vst [vmem:[%s289] sm:$0xf] %v288
    %s291 = scalar_lea.vmem [#allocation0], 224
    %v292 = vld [vmem:[%s291] sm:$0xf]
    %s293 = scalar_lea.vmem %s1, 112
    %294 = vst [vmem:[%s293] sm:$0xf] %v292
    %s295 = scalar_lea.vmem [#allocation0], 232
    %v296 = vld [vmem:[%s295] sm:$0xf]
    %s297 = scalar_lea.vmem %s1, 120
    %298 = vst [vmem:[%s297] sm:$0xf] %v296
    %s299 = scalar_lea.vmem [#allocation0], 240
    %v300 = vld [vmem:[%s299] sm:$0xf]
    %s301 = scalar_lea.vmem %s1, 116
    %302 = vst [vmem:[%s301] sm:$0xf] %v300
    %s303 = scalar_lea.vmem [#allocation0], 248
    %v304 = vld [vmem:[%s303] sm:$0xf]
    %s305 = scalar_lea.vmem %s1, 124
    %306 = vst [vmem:[%s305] sm:$0xf] %v304
    %s307 = scalar_lea.vmem [#allocation0], 256
    %v308 = vld [vmem:[%s307] sm:$0xf]
    %s309 = scalar_lea.vmem %s1, 128
    %310 = vst [vmem:[%s309] sm:$0xf] %v308
    %s311 = scalar_lea.vmem [#allocation0], 264
    %v312 = vld [vmem:[%s311] sm:$0xf]
    %s313 = scalar_lea.vmem %s1, 136
    %314 = vst [vmem:[%s313] sm:$0xf] %v312
    %s315 = scalar_lea.vmem [#allocation0], 272
    %v316 = vld [vmem:[%s315] sm:$0xf]
    %s317 = scalar_lea.vmem %s1, 132
    %318 = vst [vmem:[%s317] sm:$0xf] %v316
    %s319 = scalar_lea.vmem [#allocation0], 280
    %v320 = vld [vmem:[%s319] sm:$0xf]
    %s321 = scalar_lea.vmem %s1, 140
    %322 = vst [vmem:[%s321] sm:$0xf] %v320

// kernel: tile.31
$region0: #{tile.31}
  #allocation0 [shape = 's32[1]{0}', space=sflag, size = 0x4, scoped, tag = 'scoped memory for tile.31']
  %s0 = inlined_call_operand.vmem [shape: f32[16], index: 0, kind: input, shape index: {}]
  %s1 = inlined_call_operand.vmem [shape: f32[2,16], index: 1, kind: output, shape index: {}]
  // Predicated region
  $region2: #{tile.31} parent=0 // pred_check
    _
  $region3: #{tile.31} parent=0 // pred_check_branch
    %3 = sbr.rel (0) target = $region5
  $region4: #{tile.31} parent=0 // pred_region
    _
  $region5: #{tile.31} parent=0 // pred_fallthru
    _
  %v4 = vld [vmem:[%s0] ss:$0 sm:$0xff]
  %5 = vst [vmem:[%s1] sm:$0x3] %v4

// kernel: bottleneck_forward.1
$region0: #{bottleneck_forward.1}
  #allocation0 [shape = 'u32[]', space=smem, size = 0x4, offset = 0x4, fixed_abs, tag = 'smem constant byte address 0x4 - core index']
  #allocation1 [shape = 'u32[144,128]{1,0:T(1,128)}', space=vmem, size = 0x12000, scoped, tag = 'internal scratch']
  %s0 = inlined_call_operand.vmem [shape: f32[8,256], index: 0, kind: input, shape index: {}]
  %s1 = inlined_call_operand.vmem [shape: f32[10,8,256], index: 1, kind: input, shape index: {}]
  %s2 = inlined_call_operand.vmem [shape: f32[8,8], index: 2, kind: input, shape index: {}]
  %s3 = inlined_call_operand.vmem [shape: f32[32,8], index: 3, kind: input, shape index: {}]
  %s4 = inlined_call_operand.vmem [shape: f32[32,256], index: 4, kind: input, shape index: {}]
  %s5 = inlined_call_operand.vmem [shape: f32[8,32], index: 5, kind: input, shape index: {}]
  %s6 = inlined_call_operand.vmem [shape: f32[8,256], index: 6, kind: input, shape index: {}]
  %s7 = inlined_call_operand.vmem [shape: f32[8,256], index: 7, kind: output, shape index: {}]
  %s8 = sld [smem:[#allocation0]]
  $region38: #{bottleneck_forward.1} parent=0
    _
  %s10 = ssub.s32 1, %s8
  %s11 = scalar_select 0, %s10, %s8
  // Predicated region
  $region2: #{bottleneck_forward.1} parent=0 // pred_check
    _
  $region3: #{bottleneck_forward.1} parent=0 // pred_check_branch
    %13 = sbr.rel (0) target = $region5
  $region4: #{bottleneck_forward.1} parent=0 // pred_region
    _
  $region5: #{bottleneck_forward.1} parent=0 // pred_fallthru
    _
  // Predicated region
  $region6: #{bottleneck_forward.1} parent=0 // pred_check
    _
  $region7: #{bottleneck_forward.1} parent=0 // pred_check_branch
    %15 = sbr.rel (0) target = $region9
  $region8: #{bottleneck_forward.1} parent=0 // pred_region
    _
  $region9: #{bottleneck_forward.1} parent=0 // pred_fallthru
    _
  // Predicated region
  $region10: #{bottleneck_forward.1} parent=0 // pred_check
    _
  $region11: #{bottleneck_forward.1} parent=0 // pred_check_branch
    %17 = sbr.rel (0) target = $region13
  $region12: #{bottleneck_forward.1} parent=0 // pred_region
    _
  $region13: #{bottleneck_forward.1} parent=0 // pred_fallthru
    _
  // Predicated region
  $region14: #{bottleneck_forward.1} parent=0 // pred_check
    _
  $region15: #{bottleneck_forward.1} parent=0 // pred_check_branch
    %19 = sbr.rel (0) target = $region17
  $region16: #{bottleneck_forward.1} parent=0 // pred_region
    _
  $region17: #{bottleneck_forward.1} parent=0 // pred_fallthru
    _
  // Predicated region
  $region18: #{bottleneck_forward.1} parent=0 // pred_check
    _
  $region19: #{bottleneck_forward.1} parent=0 // pred_check_branch
    %21 = sbr.rel (0) target = $region21
  $region20: #{bottleneck_forward.1} parent=0 // pred_region
    _
  $region21: #{bottleneck_forward.1} parent=0 // pred_fallthru
    _
  // Predicated region
  $region22: #{bottleneck_forward.1} parent=0 // pred_check
    _
  $region23: #{bottleneck_forward.1} parent=0 // pred_check_branch
    %23 = sbr.rel (0) target = $region25
  $region24: #{bottleneck_forward.1} parent=0 // pred_region
    _
  $region25: #{bottleneck_forward.1} parent=0 // pred_fallthru
    _
  // Predicated region
  $region26: #{bottleneck_forward.1} parent=0 // pred_check
    _
  $region27: #{bottleneck_forward.1} parent=0 // pred_check_branch
    %25 = sbr.rel (0) target = $region29
  $region28: #{bottleneck_forward.1} parent=0 // pred_region
    _
  $region29: #{bottleneck_forward.1} parent=0 // pred_fallthru
    _
  %v26 = vld [vmem:[%s0] sm:$0xff]
  %v27 = vld [vmem:[%s0 + $0x8] sm:$0xff]
  %s28 = scalar_lea.vmem %s1, 144
  %v29 = vld [vmem:[%s28] sm:$0xff]
  %v30 = vld [vmem:[%s28 + $0x8] sm:$0xff]
  %s31 = scalar_lea.vmem %s1, 64
  %v32 = vld [vmem:[%s31] sm:$0xff]
  %v33 = vld [vmem:[%s31 + $0x8] sm:$0xff]
  %v34 = vmul.f32 %v26, %v32
  %v35 = vmul.f32 %v27, %v33
  %v36 = vadd.f32 %v29, %v34
  %v37 = vadd.f32 %v30, %v35
  %38 = vrot.lane.b32.xlu0 %v26, 17
  %v39 = vpop.permute.xlu0 %38
  %40 = vrot.lane.b32.xlu0 %v27, 17
  %v41 = vpop.permute.xlu0 %40
  %v42 = vlaneseq
  %v43 = vand.u32 %v42, 127
  %vm44 = vcmp.lt.s32.totalorder %v43, 17
  %v45 = vsel %vm44, %v39, %v41
  %v46 = vsel %vm44, %v41, %v39
  %v47 = vld [vmem:[%s1] sm:$0xff]
  %v48 = vld [vmem:[%s1 + $0x8] sm:$0xff]
  %v49 = vmul.f32 %v46, %v47
  %v50 = vmul.f32 %v45, %v48
  %v51 = vadd.f32 %v36, %v49
  %v52 = vadd.f32 %v37, %v50
  %53 = vrot.lane.b32.xlu0 %v26, 16
  %v54 = vpop.permute.xlu0 %53
  %55 = vrot.lane.b32.xlu0 %v27, 16
  %v56 = vpop.permute.xlu0 %55
  %vm57 = vcmp.lt.s32.totalorder %v43, 16
  %v58 = vsel %vm57, %v54, %v56
  %v59 = vsel %vm57, %v56, %v54
  %s60 = scalar_lea.vmem %s1, 16
  %v61 = vld [vmem:[%s60] sm:$0xff]
  %v62 = vld [vmem:[%s60 + $0x8] sm:$0xff]
  %v63 = vmul.f32 %v59, %v61
  %v64 = vmul.f32 %v58, %v62
  %v65 = vadd.f32 %v51, %v63
  %v66 = vadd.f32 %v52, %v64
  %67 = vrot.lane.b32.xlu0 %v26, 15
  %v68 = vpop.permute.xlu0 %67
  %69 = vrot.lane.b32.xlu0 %v27, 15
  %v70 = vpop.permute.xlu0 %69
  %vm71 = vcmp.lt.s32.totalorder %v43, 15
  %v72 = vsel %vm71, %v68, %v70
  %v73 = vsel %vm71, %v70, %v68
  %s74 = scalar_lea.vmem %s1, 32
  %v75 = vld [vmem:[%s74] sm:$0xff]
  %v76 = vld [vmem:[%s74 + $0x8] sm:$0xff]
  %v77 = vmul.f32 %v73, %v75
  %v78 = vmul.f32 %v72, %v76
  %v79 = vadd.f32 %v65, %v77
  %v80 = vadd.f32 %v66, %v78
  %81 = vrot.lane.b32.xlu0 %v26, 1
  %v82 = vpop.permute.xlu0 %81
  %83 = vrot.lane.b32.xlu0 %v27, 1
  %v84 = vpop.permute.xlu0 %83
  %vm85 = vcmp.lt.s32.totalorder %v43, 1
  %v86 = vsel %vm85, %v82, %v84
  %v87 = vsel %vm85, %v84, %v82
  %s88 = scalar_lea.vmem %s1, 48
  %v89 = vld [vmem:[%s88] sm:$0xff]
  %v90 = vld [vmem:[%s88 + $0x8] sm:$0xff]
  %v91 = vmul.f32 %v87, %v89
  %v92 = vmul.f32 %v86, %v90
  %v93 = vadd.f32 %v79, %v91
  %v94 = vadd.f32 %v80, %v92
  %95 = vrot.lane.b32.xlu0 %v26, 127
  %v96 = vpop.permute.xlu0 %95
  %97 = vrot.lane.b32.xlu0 %v27, 127
  %v98 = vpop.permute.xlu0 %97
  %vm99 = vcmp.lt.s32.totalorder %v43, 127
  %v100 = vsel %vm99, %v96, %v98
  %v101 = vsel %vm99, %v98, %v96
  %s102 = scalar_lea.vmem %s1, 80
  %v103 = vld [vmem:[%s102] sm:$0xff]
  %v104 = vld [vmem:[%s102 + $0x8] sm:$0xff]
  %v105 = vmul.f32 %v100, %v103
  %v106 = vmul.f32 %v101, %v104
  %v107 = vadd.f32 %v93, %v105
  %v108 = vadd.f32 %v94, %v106
  %109 = vrot.lane.b32.xlu0 %v26, 113
  %v110 = vpop.permute.xlu0 %109
  %111 = vrot.lane.b32.xlu0 %v27, 113
  %v112 = vpop.permute.xlu0 %111
  %vm113 = vcmp.lt.s32.totalorder %v43, 113
  %v114 = vsel %vm113, %v110, %v112
  %v115 = vsel %vm113, %v112, %v110
  %s116 = scalar_lea.vmem %s1, 96
  %v117 = vld [vmem:[%s116] sm:$0xff]
  %v118 = vld [vmem:[%s116 + $0x8] sm:$0xff]
  %v119 = vmul.f32 %v114, %v117
  %v120 = vmul.f32 %v115, %v118
  %v121 = vadd.f32 %v107, %v119
  %v122 = vadd.f32 %v108, %v120
  %123 = vrot.lane.b32.xlu0 %v26, 112
  %v124 = vpop.permute.xlu0 %123
  %125 = vrot.lane.b32.xlu0 %v27, 112
  %v126 = vpop.permute.xlu0 %125
  %vm127 = vcmp.lt.s32.totalorder %v43, 112
  %v128 = vsel %vm127, %v124, %v126
  %v129 = vsel %vm127, %v126, %v124
  %s130 = scalar_lea.vmem %s1, 112
  %v131 = vld [vmem:[%s130] sm:$0xff]
  %v132 = vld [vmem:[%s130 + $0x8] sm:$0xff]
  %v133 = vmul.f32 %v128, %v131
  %v134 = vmul.f32 %v129, %v132
  %v135 = vadd.f32 %v121, %v133
  %v136 = vadd.f32 %v122, %v134
  %137 = vrot.lane.b32.xlu0 %v26, 111
  %v138 = vpop.permute.xlu0 %137
  %139 = vrot.lane.b32.xlu0 %v27, 111
  %v140 = vpop.permute.xlu0 %139
  %vm141 = vcmp.lt.s32.totalorder %v43, 111
  %v142 = vsel %vm141, %v138, %v140
  %v143 = vsel %vm141, %v140, %v138
  %s144 = scalar_lea.vmem %s1, 128
  %v145 = vld [vmem:[%s144] sm:$0xff]
  %v146 = vld [vmem:[%s144 + $0x8] sm:$0xff]
  %v147 = vmul.f32 %v142, %v145
  %v148 = vmul.f32 %v143, %v146
  %v149 = vadd.f32 %v135, %v147
  %v150 = vadd.f32 %v136, %v148
  %v151 = vld [vmem:[%s2] sm:$0xff]
  %vm152 = vcmask 64512
  %v154 = vsel %vm152, %v151, 0
  %156 = vmatprep.subr.mxu0 0.0
  %157 = vmatpush1.msra.mxu0 0.0
  %158 = vmatprep.subr.mxu0 0.0
  %159 = vmatpush1.msra.mxu0 0.0
  %160 = vmatprep.subr.mxu0 0.0
  %161 = vmatpush1.msra.mxu0 0.0
  %162 = vmatprep.subr.mxu0 0.0
  %163 = vmatpush1.msra.mxu0 0.0
  %164 = vmatprep.subr.mxu0 0.0
  %165 = vmatpush1.msra.mxu0 0.0
  %166 = vmatprep.subr.mxu0 0.0
  %167 = vmatpush1.msra.mxu0 0.0
  %168 = vmatprep.subr.mxu0 0.0
  %169 = vmatpush1.msra.mxu0 0.0
  %170 = vmatprep.subr.mxu0 0.0
  %171 = vmatpush1.msra.mxu0 0.0
  %172 = vmatprep.subr.mxu0 0.0
  %173 = vmatpush1.msra.mxu0 0.0
  %174 = vmatprep.subr.mxu0 0.0
  %175 = vmatpush1.msra.mxu0 0.0
  %176 = vmatprep.subr.mxu0 0.0
  %177 = vmatpush1.msra.mxu0 0.0
  %178 = vmatprep.subr.mxu0 0.0
  %179 = vmatpush1.msra.mxu0 0.0
  %180 = vmatprep.subr.mxu0 0.0
  %181 = vmatpush1.msra.mxu0 0.0
  %182 = vmatprep.subr.mxu0 0.0
  %183 = vmatpush1.msra.mxu0 0.0
  %184 = vmatprep.subr.mxu0 0.0
  %185 = vmatpush1.msra.mxu0 0.0
  %186 = vmatprep.subr.mxu0 %v150
  %187 = vmatpush1.msra.mxu0 %v149
  %188 = vmatprep.subr.mxu0 0.0
  %189 = vmatpush2.msra.mxu0 0.0
  %190 = vmatprep.subr.mxu0 0.0
  %191 = vmatpush2.msra.mxu0 0.0
  %192 = vmatprep.subr.mxu0 0.0
  %193 = vmatpush2.msra.mxu0 0.0
  %194 = vmatprep.subr.mxu0 0.0
  %195 = vmatpush2.msra.mxu0 0.0
  %196 = vmatprep.subr.mxu0 0.0
  %197 = vmatpush2.msra.mxu0 0.0
  %198 = vmatprep.subr.mxu0 0.0
  %199 = vmatpush2.msra.mxu0 0.0
  %200 = vmatprep.subr.mxu0 0.0
  %201 = vmatpush2.msra.mxu0 0.0
  %202 = vmatprep.subr.mxu0 0.0
  %203 = vmatpush2.msra.mxu0 0.0
  %204 = vmatprep.subr.mxu0 0.0
  %205 = vmatpush2.msra.mxu0 0.0
  %206 = vmatprep.subr.mxu0 0.0
  %207 = vmatpush2.msra.mxu0 0.0
  %208 = vmatprep.subr.mxu0 0.0
  %209 = vmatpush2.msra.mxu0 0.0
  %210 = vmatprep.subr.mxu0 0.0
  %211 = vmatpush2.msra.mxu0 0.0
  %212 = vmatprep.subr.mxu0 0.0
  %213 = vmatpush2.msra.mxu0 0.0
  %214 = vmatprep.subr.mxu0 0.0
  %215 = vmatpush2.msra.mxu0 0.0
  %216 = vmatprep.subr.mxu0 0.0
  %217 = vmatpush2.msra.mxu0 0.0
  %218 = vmatprep.subr.mxu0 0.0
  %219 = vmatpush2.msra.mxu0 0.0
  %220 = vmatprep.mubr.f32.mxu0 0.0
  %221 = vmatmul.mubr.f32.gmra.mxu0 %v154
  %v222 = vpop.f32.mrf.mxu0
  %v223 = vadd.f32 0.0, %v222
  %v224 = vpop.f32.mrf.mxu0
  %v225 = vadd.f32 0.0, %v224
  %226 = vdwg.mxu0
  %v227 = vmul.f32 %v223, 0.25
  %v228 = vmul.f32 %v225, 0.25
  %v229 = vmul.f32 %v149, %v149
  %v230 = vmul.f32 %v150, %v150
  %231 = vmatprep.subr.mxu0 0.0
  %232 = vmatpush1.msra.mxu0 0.0
  %233 = vmatprep.subr.mxu0 0.0
  %234 = vmatpush1.msra.mxu0 0.0
  %235 = vmatprep.subr.mxu0 0.0
  %236 = vmatpush1.msra.mxu0 0.0
  %237 = vmatprep.subr.mxu0 0.0
  %238 = vmatpush1.msra.mxu0 0.0
  %239 = vmatprep.subr.mxu0 0.0
  %240 = vmatpush1.msra.mxu0 0.0
  %241 = vmatprep.subr.mxu0 0.0
  %242 = vmatpush1.msra.mxu0 0.0
  %243 = vmatprep.subr.mxu0 0.0
  %244 = vmatpush1.msra.mxu0 0.0
  %245 = vmatprep.subr.mxu0 0.0
  %246 = vmatpush1.msra.mxu0 0.0
  %247 = vmatprep.subr.mxu0 0.0
  %248 = vmatpush1.msra.mxu0 0.0
  %249 = vmatprep.subr.mxu0 0.0
  %250 = vmatpush1.msra.mxu0 0.0
  %251 = vmatprep.subr.mxu0 0.0
  %252 = vmatpush1.msra.mxu0 0.0
  %253 = vmatprep.subr.mxu0 0.0
  %254 = vmatpush1.msra.mxu0 0.0
  %255 = vmatprep.subr.mxu0 0.0
  %256 = vmatpush1.msra.mxu0 0.0
  %257 = vmatprep.subr.mxu0 0.0
  %258 = vmatpush1.msra.mxu0 0.0
  %259 = vmatprep.subr.mxu0 0.0
  %260 = vmatpush1.msra.mxu0 0.0
  %261 = vmatprep.subr.mxu0 %v230
  %262 = vmatpush1.msra.mxu0 %v229
  %263 = vmatprep.subr.mxu0 0.0
  %264 = vmatpush2.msra.mxu0 0.0
  %265 = vmatprep.subr.mxu0 0.0
  %266 = vmatpush2.msra.mxu0 0.0
  %267 = vmatprep.subr.mxu0 0.0
  %268 = vmatpush2.msra.mxu0 0.0
  %269 = vmatprep.subr.mxu0 0.0
  %270 = vmatpush2.msra.mxu0 0.0
  %271 = vmatprep.subr.mxu0 0.0
  %272 = vmatpush2.msra.mxu0 0.0
  %273 = vmatprep.subr.mxu0 0.0
  %274 = vmatpush2.msra.mxu0 0.0
  %275 = vmatprep.subr.mxu0 0.0
  %276 = vmatpush2.msra.mxu0 0.0
  %277 = vmatprep.subr.mxu0 0.0
  %278 = vmatpush2.msra.mxu0 0.0
  %279 = vmatprep.subr.mxu0 0.0
  %280 = vmatpush2.msra.mxu0 0.0
  %281 = vmatprep.subr.mxu0 0.0
  %282 = vmatpush2.msra.mxu0 0.0
  %283 = vmatprep.subr.mxu0 0.0
  %284 = vmatpush2.msra.mxu0 0.0
  %285 = vmatprep.subr.mxu0 0.0
  %286 = vmatpush2.msra.mxu0 0.0
  %287 = vmatprep.subr.mxu0 0.0
  %288 = vmatpush2.msra.mxu0 0.0
  %289 = vmatprep.subr.mxu0 0.0
  %290 = vmatpush2.msra.mxu0 0.0
  %291 = vmatprep.subr.mxu0 0.0
  %292 = vmatpush2.msra.mxu0 0.0
  %293 = vmatprep.subr.mxu0 0.0
  %294 = vmatpush2.msra.mxu0 0.0
  %295 = vmatprep.mubr.f32.mxu0 0.0
  %296 = vmatmul.mubr.f32.gmra.mxu0 %v154
  %v297 = vpop.f32.mrf.mxu0
  %v298 = vadd.f32 0.0, %v297
  %v299 = vpop.f32.mrf.mxu0
  %v300 = vadd.f32 0.0, %v299
  %301 = vdwg.mxu0
  %v302 = vmul.f32 %v298, 0.25
  %v303 = vmul.f32 %v300, 0.25
  %v304 = vmul.f32 %v227, %v227
  %v305 = vmul.f32 %v228, %v228
  %v306 = vsub.f32 %v302, %v304
  %v307 = vsub.f32 %v303, %v305
  %v308 = vsub.f32 %v149, %v227
  %v309 = vsub.f32 %v150, %v228
  %v310 = vadd.f32 %v306, 1e-05
  %v311 = vadd.f32 %v307, 1e-05
  %v312 = vrsqrt.pop %v310
  %v313 = vrsqrt.pop %v311
  %v314 = vmul.f32 %v308, %v312
  %v315 = vmul.f32 %v309, %v313
  %v316 = vld [vmem:[%s3] sm:$0xff]
  %v317 = vld [vmem:[%s3 + $0x8] sm:$0xff]
  %v318 = vld [vmem:[%s3 + $0x10] sm:$0xff]
  %v319 = vld [vmem:[%s3 + $0x18] sm:$0xff]
  %v320 = vld [vmem:[%s4] sm:$0xff]
  %v321 = vld [vmem:[%s4 + $0x8] sm:$0xff]
  %v322 = vld [vmem:[%s4 + $0x10] sm:$0xff]
  %v323 = vld [vmem:[%s4 + $0x18] sm:$0xff]
  %v324 = vld [vmem:[%s4 + $0x20] sm:$0xff]
  %v325 = vld [vmem:[%s4 + $0x28] sm:$0xff]
  %v326 = vld [vmem:[%s4 + $0x30] sm:$0xff]
  %v327 = vld [vmem:[%s4 + $0x38] sm:$0xff]
  %v329 = vsel %vm152, %v316, 0
  %v332 = vsel %vm152, %v317, 0
  %v335 = vsel %vm152, %v318, 0
  %v338 = vsel %vm152, %v319, 0
  %340 = vmatprep.subr.mxu0 0.0
  %341 = vmatpush1.msra.mxu0 0.0
  %342 = vmatprep.subr.mxu0 0.0
  %343 = vmatpush1.msra.mxu0 0.0
  %344 = vmatprep.subr.mxu0 0.0
  %345 = vmatpush1.msra.mxu0 0.0
  %346 = vmatprep.subr.mxu0 0.0
  %347 = vmatpush1.msra.mxu0 0.0
  %348 = vmatprep.subr.mxu0 0.0
  %349 = vmatpush1.msra.mxu0 0.0
  %350 = vmatprep.subr.mxu0 0.0
  %351 = vmatpush1.msra.mxu0 0.0
  %352 = vmatprep.subr.mxu0 0.0
  %353 = vmatpush1.msra.mxu0 0.0
  %354 = vmatprep.subr.mxu0 0.0
  %355 = vmatpush1.msra.mxu0 0.0
  %356 = vmatprep.subr.mxu0 0.0
  %357 = vmatpush1.msra.mxu0 0.0
  %358 = vmatprep.subr.mxu0 0.0
  %359 = vmatpush1.msra.mxu0 0.0
  %360 = vmatprep.subr.mxu0 0.0
  %361 = vmatpush1.msra.mxu0 0.0
  %362 = vmatprep.subr.mxu0 0.0
  %363 = vmatpush1.msra.mxu0 0.0
  %364 = vmatprep.subr.mxu0 0.0
  %365 = vmatpush1.msra.mxu0 0.0
  %366 = vmatprep.subr.mxu0 0.0
  %367 = vmatpush1.msra.mxu0 0.0
  %368 = vmatprep.subr.mxu0 0.0
  %369 = vmatpush1.msra.mxu0 0.0
  %370 = vmatprep.subr.mxu0 %v315
  %371 = vmatpush1.msra.mxu0 %v314
  %372 = vmatprep.subr.mxu0 0.0
  %373 = vmatpush2.msra.mxu0 0.0
  %374 = vmatprep.subr.mxu0 0.0
  %375 = vmatpush2.msra.mxu0 0.0
  %376 = vmatprep.subr.mxu0 0.0
  %377 = vmatpush2.msra.mxu0 0.0
  %378 = vmatprep.subr.mxu0 0.0
  %379 = vmatpush2.msra.mxu0 0.0
  %380 = vmatprep.subr.mxu0 0.0
  %381 = vmatpush2.msra.mxu0 0.0
  %382 = vmatprep.subr.mxu0 0.0
  %383 = vmatpush2.msra.mxu0 0.0
  %384 = vmatprep.subr.mxu0 0.0
  %385 = vmatpush2.msra.mxu0 0.0
  %386 = vmatprep.subr.mxu0 0.0
  %387 = vmatpush2.msra.mxu0 0.0
  %388 = vmatprep.subr.mxu0 0.0
  %389 = vmatpush2.msra.mxu0 0.0
  %390 = vmatprep.subr.mxu0 0.0
  %391 = vmatpush2.msra.mxu0 0.0
  %392 = vmatprep.subr.mxu0 0.0
  %393 = vmatpush2.msra.mxu0 0.0
  %394 = vmatprep.subr.mxu0 0.0
  %395 = vmatpush2.msra.mxu0 0.0
  %396 = vmatprep.subr.mxu0 0.0
  %397 = vmatpush2.msra.mxu0 0.0
  %398 = vmatprep.subr.mxu0 0.0
  %399 = vmatpush2.msra.mxu0 0.0
  %400 = vmatprep.subr.mxu0 0.0
  %401 = vmatpush2.msra.mxu0 0.0
  %402 = vmatprep.subr.mxu0 0.0
  %403 = vmatpush2.msra.mxu0 0.0
  %404 = vmatprep.mubr.f32.mxu0 0.0
  %405 = vmatmul.mubr.f32.gmra.mxu0 %v329
  %v406 = vpop.f32.mrf.mxu0
  %v407 = vadd.f32 %v320, %v406
  %v408 = vpop.f32.mrf.mxu0
  %v409 = vadd.f32 %v321, %v408
  %410 = vmatprep.mubr.f32.mxu0 0.0
  %411 = vmatmul.mubr.f32.gmra.mxu0 %v332
  %v412 = vpop.f32.mrf.mxu0
  %v413 = vadd.f32 %v322, %v412
  %v414 = vpop.f32.mrf.mxu0
  %v415 = vadd.f32 %v323, %v414
  %416 = vmatprep.mubr.f32.mxu0 0.0
  %417 = vmatmul.mubr.f32.gmra.mxu0 %v335
  %v418 = vpop.f32.mrf.mxu0
  %v419 = vadd.f32 %v324, %v418
  %v420 = vpop.f32.mrf.mxu0
  %v421 = vadd.f32 %v325, %v420
  %422 = vmatprep.mubr.f32.mxu0 0.0
  %423 = vmatmul.mubr.f32.gmra.mxu0 %v338
  %v424 = vpop.f32.mrf.mxu0
  %v425 = vadd.f32 %v326, %v424
  %v426 = vpop.f32.mrf.mxu0
  %v427 = vadd.f32 %v327, %v426
  %428 = vdwg.mxu0
  %v429 = vmul.f32 %v407, 0.5
  %v430 = vmul.f32 %v409, 0.5
  %v431 = vmul.f32 %v413, 0.5
  %v432 = vmul.f32 %v415, 0.5
  %v433 = vmul.f32 %v419, 0.5
  %v434 = vmul.f32 %v421, 0.5
  %v435 = vmul.f32 %v425, 0.5
  %v436 = vmul.f32 %v427, 0.5
  %v437 = vmul.f32 %v407, 0.70710677
  %v438 = vmul.f32 %v409, 0.70710677
  %v439 = vmul.f32 %v413, 0.70710677
  %v440 = vmul.f32 %v415, 0.70710677
  %v441 = vmul.f32 %v419, 0.70710677
  %v442 = vmul.f32 %v421, 0.70710677
  %v443 = vmul.f32 %v425, 0.70710677
  %v444 = vmul.f32 %v427, 0.70710677
  %v445 = vand.u32 2147483647, %v437
  %v446 = vand.u32 2147483647, %v438
  %v447 = vand.u32 2147483647, %v439
  %v448 = vand.u32 2147483647, %v440
  %v449 = vand.u32 2147483647, %v441
  %v450 = vand.u32 2147483647, %v442
  %v451 = vand.u32 2147483647, %v443
  %v452 = vand.u32 2147483647, %v444
  %v453 = vmul.f32 %v445, 0.3275911
  %v454 = vmul.f32 %v446, 0.3275911
  %v455 = vmul.f32 %v447, 0.3275911
  %v456 = vmul.f32 %v448, 0.3275911
  %v457 = vmul.f32 %v449, 0.3275911
  %v458 = vmul.f32 %v450, 0.3275911
  %v459 = vmul.f32 %v451, 0.3275911
  %v460 = vmul.f32 %v452, 0.3275911
  %v461 = vadd.f32 %v453, 1.0
  %v462 = vadd.f32 %v454, 1.0
  %v463 = vadd.f32 %v455, 1.0
  %v464 = vadd.f32 %v456, 1.0
  %v465 = vadd.f32 %v457, 1.0
  %v466 = vadd.f32 %v458, 1.0
  %v467 = vadd.f32 %v459, 1.0
  %v468 = vadd.f32 %v460, 1.0
  %v469 = vrcp.pop %v461
  %v470 = vmul.f32 1.0, %v469
  %v471 = vrcp.pop %v462
  %v472 = vmul.f32 1.0, %v471
  %v473 = vrcp.pop %v463
  %v474 = vmul.f32 1.0, %v473
  %v475 = vrcp.pop %v464
  %v476 = vmul.f32 1.0, %v475
  %v477 = vrcp.pop %v465
  %v478 = vmul.f32 1.0, %v477
  %v479 = vrcp.pop %v466
  %v480 = vmul.f32 1.0, %v479
  %v481 = vrcp.pop %v467
  %v482 = vmul.f32 1.0, %v481
  %v483 = vrcp.pop %v468
  %v484 = vmul.f32 1.0, %v483
  %v485 = vmul.f32 %v470, 1.0614054
  %v486 = vmul.f32 %v472, 1.0614054
  %v487 = vmul.f32 %v474, 1.0614054
  %v488 = vmul.f32 %v476, 1.0614054
  %v489 = vmul.f32 %v478, 1.0614054
  %v490 = vmul.f32 %v480, 1.0614054
  %v491 = vmul.f32 %v482, 1.0614054
  %v492 = vmul.f32 %v484, 1.0614054
  %v493 = vadd.f32 %v485, -1.4531521
  %v494 = vadd.f32 %v486, -1.4531521
  %v495 = vadd.f32 %v487, -1.4531521
  %v496 = vadd.f32 %v488, -1.4531521
  %v497 = vadd.f32 %v489, -1.4531521
  %v498 = vadd.f32 %v490, -1.4531521
  %v499 = vadd.f32 %v491, -1.4531521
  %v500 = vadd.f32 %v492, -1.4531521
  %v501 = vmul.f32 %v493, %v470
  %v502 = vmul.f32 %v494, %v472
  %v503 = vmul.f32 %v495, %v474
  %v504 = vmul.f32 %v496, %v476
  %v505 = vmul.f32 %v497, %v478
  %v506 = vmul.f32 %v498, %v480
  %v507 = vmul.f32 %v499, %v482
  %v508 = vmul.f32 %v500, %v484
  %v509 = vadd.f32 %v501, 1.4214138
  %v510 = vadd.f32 %v502, 1.4214138
  %v511 = vadd.f32 %v503, 1.4214138
  %v512 = vadd.f32 %v504, 1.4214138
  %v513 = vadd.f32 %v505, 1.4214138
  %v514 = vadd.f32 %v506, 1.4214138
  %v515 = vadd.f32 %v507, 1.4214138
  %v516 = vadd.f32 %v508, 1.4214138
  %v517 = vmul.f32 %v509, %v470
  %v518 = vmul.f32 %v510, %v472
  %v519 = vmul.f32 %v511, %v474
  %v520 = vmul.f32 %v512, %v476
  %v521 = vmul.f32 %v513, %v478
  %v522 = vmul.f32 %v514, %v480
  %v523 = vmul.f32 %v515, %v482
  %v524 = vmul.f32 %v516, %v484
  %v525 = vadd.f32 %v517, -0.28449672
  %v526 = vadd.f32 %v518, -0.28449672
  %v527 = vadd.f32 %v519, -0.28449672
  %v528 = vadd.f32 %v520, -0.28449672
  %v529 = vadd.f32 %v521, -0.28449672
  %v530 = vadd.f32 %v522, -0.28449672
  %v531 = vadd.f32 %v523, -0.28449672
  %v532 = vadd.f32 %v524, -0.28449672
  %v533 = vmul.f32 %v525, %v470
  %v534 = vmul.f32 %v526, %v472
  %v535 = vmul.f32 %v527, %v474
  %v536 = vmul.f32 %v528, %v476
  %v537 = vmul.f32 %v529, %v478
  %v538 = vmul.f32 %v530, %v480
  %v539 = vmul.f32 %v531, %v482
  %v540 = vmul.f32 %v532, %v484
  %v541 = vadd.f32 %v533, 0.2548296
  %v542 = vadd.f32 %v534, 0.2548296
  %v543 = vadd.f32 %v535, 0.2548296
  %v544 = vadd.f32 %v536, 0.2548296
  %v545 = vadd.f32 %v537, 0.2548296
  %v546 = vadd.f32 %v538, 0.2548296
  %v547 = vadd.f32 %v539, 0.2548296
  %v548 = vadd.f32 %v540, 0.2548296
  %v549 = vmul.f32 %v541, %v470
  %v550 = vmul.f32 %v542, %v472
  %v551 = vmul.f32 %v543, %v474
  %v552 = vmul.f32 %v544, %v476
  %v553 = vmul.f32 %v545, %v478
  %v554 = vmul.f32 %v546, %v480
  %v555 = vmul.f32 %v547, %v482
  %v556 = vmul.f32 %v548, %v484
  %v557 = vsub.f32 0.0, %v445
  %v558 = vsub.f32 0.0, %v446
  %v559 = vsub.f32 0.0, %v447
  %v560 = vsub.f32 0.0, %v448
  %v561 = vsub.f32 0.0, %v449
  %v562 = vsub.f32 0.0, %v450
  %v563 = vsub.f32 0.0, %v451
  %v564 = vsub.f32 0.0, %v452
  %v565 = vmul.f32 %v557, %v445
  %v566 = vmul.f32 %v558, %v446
  %v567 = vmul.f32 %v559, %v447
  %v568 = vmul.f32 %v560, %v448
  %v569 = vmul.f32 %v561, %v449
  %v570 = vmul.f32 %v562, %v450
  %v571 = vmul.f32 %v563, %v451
  %v572 = vmul.f32 %v564, %v452
  %v573 = vmul.f32 %v565, 1.442695
  %v574 = vpow.pop %v573
  %v575 = vmul.f32 %v566, 1.442695
  %v576 = vpow.pop %v575
  %v577 = vmul.f32 %v567, 1.442695
  %v578 = vpow.pop %v577
  %v579 = vmul.f32 %v568, 1.442695
  %v580 = vpow.pop %v579
  %v581 = vmul.f32 %v569, 1.442695
  %v582 = vpow.pop %v581
  %v583 = vmul.f32 %v570, 1.442695
  %v584 = vpow.pop %v583
  %v585 = vmul.f32 %v571, 1.442695
  %v586 = vpow.pop %v585
  %v587 = vmul.f32 %v572, 1.442695
  %v588 = vpow.pop %v587
  %v589 = vmul.f32 %v549, %v574
  %v590 = vmul.f32 %v550, %v576
  %v591 = vmul.f32 %v551, %v578
  %v592 = vmul.f32 %v552, %v580
  %v593 = vmul.f32 %v553, %v582
  %v594 = vmul.f32 %v554, %v584
  %v595 = vmul.f32 %v555, %v586
  %v596 = vmul.f32 %v556, %v588
  %v597 = vsub.f32 1.0, %v589
  %v598 = vsub.f32 1.0, %v590
  %v599 = vsub.f32 1.0, %v591
  %v600 = vsub.f32 1.0, %v592
  %v601 = vsub.f32 1.0, %v593
  %v602 = vsub.f32 1.0, %v594
  %v603 = vsub.f32 1.0, %v595
  %v604 = vsub.f32 1.0, %v596
  %vm605 = vcmp.ge.f32.partialorder %v437, 0.0
  %vm606 = vcmp.ge.f32.partialorder %v438, 0.0
  %vm607 = vcmp.ge.f32.partialorder %v439, 0.0
  %vm608 = vcmp.ge.f32.partialorder %v440, 0.0
  %vm609 = vcmp.ge.f32.partialorder %v441, 0.0
  %vm610 = vcmp.ge.f32.partialorder %v442, 0.0
  %vm611 = vcmp.ge.f32.partialorder %v443, 0.0
  %vm612 = vcmp.ge.f32.partialorder %v444, 0.0
  %v613 = vsub.f32 0.0, %v597
  %v614 = vsub.f32 0.0, %v598
  %v615 = vsub.f32 0.0, %v599
  %v616 = vsub.f32 0.0, %v600
  %v617 = vsub.f32 0.0, %v601
  %v618 = vsub.f32 0.0, %v602
  %v619 = vsub.f32 0.0, %v603
  %v620 = vsub.f32 0.0, %v604
  %v621 = vsel %vm605, %v597, %v613
  %v622 = vsel %vm606, %v598, %v614
  %v623 = vsel %vm607, %v599, %v615
  %v624 = vsel %vm608, %v600, %v616
  %v625 = vsel %vm609, %v601, %v617
  %v626 = vsel %vm610, %v602, %v618
  %v627 = vsel %vm611, %v603, %v619
  %v628 = vsel %vm612, %v604, %v620
  %v629 = vadd.f32 %v621, 1.0
  %v630 = vadd.f32 %v622, 1.0
  %v631 = vadd.f32 %v623, 1.0
  %v632 = vadd.f32 %v624, 1.0
  %v633 = vadd.f32 %v625, 1.0
  %v634 = vadd.f32 %v626, 1.0
  %v635 = vadd.f32 %v627, 1.0
  %v636 = vadd.f32 %v628, 1.0
  %v637 = vmul.f32 %v429, %v629
  %v638 = vmul.f32 %v430, %v630
  %v639 = vmul.f32 %v431, %v631
  %v640 = vmul.f32 %v432, %v632
  %v641 = vmul.f32 %v433, %v633
  %v642 = vmul.f32 %v434, %v634
  %v643 = vmul.f32 %v435, %v635
  %v644 = vmul.f32 %v436, %v636
  %v645 = vld [vmem:[%s5] sm:$0xff]
  %v646 = vld [vmem:[%s6] sm:$0xff]
  %v647 = vld [vmem:[%s6 + $0x8] sm:$0xff]
  %vm648 = vcmask 261120
  %v650 = vsel %vm648, %v645, 0
  %652 = vmatprep.subr.mxu0 0.0
  %653 = vmatpush1.msra.mxu0 0.0
  %654 = vmatprep.subr.mxu0 0.0
  %655 = vmatpush1.msra.mxu0 0.0
  %656 = vmatprep.subr.mxu0 0.0
  %657 = vmatpush1.msra.mxu0 0.0
  %658 = vmatprep.subr.mxu0 0.0
  %659 = vmatpush1.msra.mxu0 0.0
  %660 = vmatprep.subr.mxu0 0.0
  %661 = vmatpush1.msra.mxu0 0.0
  %662 = vmatprep.subr.mxu0 0.0
  %663 = vmatpush1.msra.mxu0 0.0
  %664 = vmatprep.subr.mxu0 0.0
  %665 = vmatpush1.msra.mxu0 0.0
  %666 = vmatprep.subr.mxu0 0.0
  %667 = vmatpush1.msra.mxu0 0.0
  %668 = vmatprep.subr.mxu0 0.0
  %669 = vmatpush1.msra.mxu0 0.0
  %670 = vmatprep.subr.mxu0 0.0
  %671 = vmatpush1.msra.mxu0 0.0
  %672 = vmatprep.subr.mxu0 0.0
  %673 = vmatpush1.msra.mxu0 0.0
  %674 = vmatprep.subr.mxu0 0.0
  %675 = vmatpush1.msra.mxu0 0.0
  %676 = vmatprep.subr.mxu0 %v644
  %677 = vmatpush1.msra.mxu0 %v643
  %678 = vmatprep.subr.mxu0 %v642
  %679 = vmatpush1.msra.mxu0 %v641
  %680 = vmatprep.subr.mxu0 %v640
  %681 = vmatpush1.msra.mxu0 %v639
  %682 = vmatprep.subr.mxu0 %v638
  %683 = vmatpush1.msra.mxu0 %v637
  %684 = vmatprep.subr.mxu0 0.0
  %685 = vmatpush2.msra.mxu0 0.0
  %686 = vmatprep.subr.mxu0 0.0
  %687 = vmatpush2.msra.mxu0 0.0
  %688 = vmatprep.subr.mxu0 0.0
  %689 = vmatpush2.msra.mxu0 0.0
  %690 = vmatprep.subr.mxu0 0.0
  %691 = vmatpush2.msra.mxu0 0.0
  %692 = vmatprep.subr.mxu0 0.0
  %693 = vmatpush2.msra.mxu0 0.0
  %694 = vmatprep.subr.mxu0 0.0
  %695 = vmatpush2.msra.mxu0 0.0
  %696 = vmatprep.subr.mxu0 0.0
  %697 = vmatpush2.msra.mxu0 0.0
  %698 = vmatprep.subr.mxu0 0.0
  %699 = vmatpush2.msra.mxu0 0.0
  %700 = vmatprep.subr.mxu0 0.0
  %701 = vmatpush2.msra.mxu0 0.0
  %702 = vmatprep.subr.mxu0 0.0
  %703 = vmatpush2.msra.mxu0 0.0
  %704 = vmatprep.subr.mxu0 0.0
  %705 = vmatpush2.msra.mxu0 0.0
  %706 = vmatprep.subr.mxu0 0.0
  %707 = vmatpush2.msra.mxu0 0.0
  %708 = vmatprep.subr.mxu0 0.0
  %709 = vmatpush2.msra.mxu0 0.0
  %710 = vmatprep.subr.mxu0 0.0
  %711 = vmatpush2.msra.mxu0 0.0
  %712 = vmatprep.subr.mxu0 0.0
  %713 = vmatpush2.msra.mxu0 0.0
  %714 = vmatprep.subr.mxu0 0.0
  %715 = vmatpush2.msra.mxu0 0.0
  %716 = vmatprep.mubr.f32.mxu0 0.0
  %717 = vmatmul.mubr.f32.gmra.mxu0 %v650
  %v718 = vpop.f32.mrf.mxu0
  %v719 = vadd.f32 %v646, %v718
  %v720 = vpop.f32.mrf.mxu0
  %v721 = vadd.f32 %v647, %v720
  %722 = vdwg.mxu0
  %v723 = vadd.f32 %v719, %v26
  %v724 = vadd.f32 %v721, %v27
  %725 = vst [vmem:[%s7] sm:$0xff] %v723
  %726 = vst [vmem:[%s7 + $0x8] sm:$0xff] %v724
  // Predicated region
  $region30: #{bottleneck_forward.1} parent=0 // pred_check
    _
  $region31: #{bottleneck_forward.1} parent=0 // pred_check_branch
    %728 = sbr.rel (0) target = $region33
  $region32: #{bottleneck_forward.1} parent=0 // pred_region
    _
  $region33: #{bottleneck_forward.1} parent=0 // pred_fallthru
    _
  // Predicated region
  $region34: #{bottleneck_forward.1} parent=0 // pred_check
    _
  $region35: #{bottleneck_forward.1} parent=0 // pred_check_branch
    %730 = sbr.rel (0) target = $region37
  $region36: #{bottleneck_forward.1} parent=0 // pred_region
    _
  $region37: #{bottleneck_forward.1} parent=0 // pred_fallthru
    _

</llo_original>
